<compile_context>
chip_gen: v6e
topology: v6e:2x2x1
jax: 0.10.0
libtpu: 0.0.40
codegen_flags: <defaults>
</compile_context>

<pallas_src>
import jax
import jax.numpy as jnp
from jax import lax
from jax.experimental import pallas as pl
from jax.experimental.pallas import tpu as pltpu  # noqa: F401  (TPU backend)


# ----------------------------- fused kernel --------------------------------

def make_fused_classifier_kernel(num_fc, negative_slope, eps):
    """Build a kernel: (x, [W,gamma,beta]*num_fc, W_out, b_out, o) -> o."""

    def kernel(*refs):
        x_ref = refs[0]
        o_ref = refs[-1]

        h = x_ref[...].astype(jnp.float32)
        idx = 1
        for _ in range(num_fc):
            w_ref, gamma_ref, beta_ref = refs[idx], refs[idx + 1], refs[idx + 2]
            idx += 3

            # MXU matmul, f32 accumulation. (Linear bias omitted: it is exactly
            # cancelled by the training-mode BN mean subtraction below.)
            y = jnp.dot(h, w_ref[...], preferred_element_type=jnp.float32)

            # One-pass batch statistics (biased variance, as in BatchNorm1d).
            inv_b = jnp.float32(1.0 / y.shape[0])
            s = jnp.sum(y, axis=0, keepdims=True)
            ss = jnp.sum(y * y, axis=0, keepdims=True)
            mean = s * inv_b
            var = jnp.maximum(ss * inv_b - mean * mean, 0.0)

            # Normalize (rsqrt -> EUP slot), affine, LeakyReLU.
            y = (y - mean) * lax.rsqrt(var + eps)
            y = y * gamma_ref[...] + beta_ref[...]
            h = jnp.where(y >= 0, y, negative_slope * y)

        # Output head: plain Linear with bias (no BN after it, bias matters).
        w_o_ref, b_o_ref = refs[idx], refs[idx + 1]
        out = jnp.dot(h, w_o_ref[...], preferred_element_type=jnp.float32)
        out = out + b_o_ref[...]
        o_ref[...] = out.astype(o_ref.dtype)

    return kernel


# ----------------------------- wrapper --------------------------------------

def _full_spec(shape):
    # Whole array in one VMEM block (all shapes here are tiny; block == array
    # dims satisfies the (8,128) constraint).
    nd = len(shape)
    return pl.BlockSpec(shape, lambda: (0,) * nd)


def classifier_forward(params, x, *, negative_slope=0.2, eps=1e-3):
    """Single fused pallas_call for the whole classifier."""
    inputs = [x]
    for (w, _b, gamma, beta) in params["fc"]:
        # FC-layer bias is dropped on purpose (cancelled by training-mode BN).
        inputs += [w, gamma, beta]
    w_o, b_o = params["out"]
    inputs += [w_o, b_o]

    B = x.shape[0]
    N = w_o.shape[1]
    kernel = make_fused_classifier_kernel(len(params["fc"]), negative_slope, eps)

    return pl.pallas_call(
        kernel,
        out_shape=jax.ShapeDtypeStruct((B, N), x.dtype),
        in_specs=[_full_spec(a.shape) for a in inputs],
        out_specs=_full_spec((B, N)),
    )(*inputs)


# ----------------------------- parameter init -------------------------------

def init_linear_params(key, n_in, n_out, dtype=jnp.float32):
    """nn.Linear-style uniform(-1/sqrt(fan_in), 1/sqrt(fan_in)) init, (in,out) layout."""
    kw, kb = jax.random.split(key)
    bound = 1.0 / jnp.sqrt(jnp.float32(n_in))
    w = jax.random.uniform(kw, (n_in, n_out), dtype, -bound, bound)
    b = jax.random.uniform(kb, (1, n_out), dtype, -bound, bound)
    return w, b


def init_classifier_params(key, features):
    """features = [f0, ..., f_{k-1}, f_k]; FC over features[:-1], head f_{k-1}->f_k."""
    params = {"fc": [], "out": None}
    fc_feats = features[:-1]
    for n_in, n_out in zip(fc_feats[:-1], fc_feats[1:]):
        key, sub = jax.random.split(key)
        w, b = init_linear_params(sub, n_in, n_out)
        gamma = jnp.ones((1, n_out), jnp.float32)   # BatchNorm1d default affine
        beta = jnp.zeros((1, n_out), jnp.float32)
        params["fc"].append((w, b, gamma, beta))
    key, sub = jax.random.split(key)
    params["out"] = init_linear_params(sub, features[-2], features[-1])
    return params


# ----------------------------- pure-JAX reference ----------------------------

def classifier_forward_ref(params, x, *, negative_slope=0.2, eps=1e-3):
    """Faithful reference of the PyTorch forward (incl. the pre-BN bias)."""
    for (w, b, gamma, beta) in params["fc"]:
        y = x @ w + b
        mean = jnp.mean(y, axis=0, keepdims=True)
        var = jnp.mean((y - mean) ** 2, axis=0, keepdims=True)   # biased variance
        y = (y - mean) * lax.rsqrt(var + eps) * gamma + beta
        x = jnp.where(y >= 0, y, negative_slope * y)
    w_o, b_o = params["out"]
    return x @ w_o + b_o


# ----------------------------- main ------------------------------------------

if __name__ == "__main__":
    key = jax.random.PRNGKey(0)
    k_param, k_x = jax.random.split(key)

    # Small, forward-consistent shapes: input dim 32, hidden 64/48, 16 classes.
    features = [32, 64, 48, 16]
    B = 8  # multiple of the f32 sublane count

    params = init_classifier_params(k_param, features)
    x = jax.random.normal(k_x, (B, features[0]), jnp.float32)

    fwd = jax.jit(classifier_forward)
    out = jax.block_until_ready(fwd(params, x))

    ref = classifier_forward_ref(params, x)
    assert out.shape == (B, features[-1]), out.shape
    assert jnp.allclose(out, ref, atol=1e-4, rtol=1e-4), \
        float(jnp.max(jnp.abs(out - ref)))

    print("KERNEL_OK")
</pallas_src>

<mosaic_0001>
module attributes {stable_mosaic.version = 11 : i64} {
  func.func @kernel(%arg0: memref<8x32xf32, #tpu.memory_space<vmem>>, %arg1: memref<32x64xf32, #tpu.memory_space<vmem>>, %arg2: memref<1x64xf32, #tpu.memory_space<vmem>>, %arg3: memref<1x64xf32, #tpu.memory_space<vmem>>, %arg4: memref<64x48xf32, #tpu.memory_space<vmem>>, %arg5: memref<1x48xf32, #tpu.memory_space<vmem>>, %arg6: memref<1x48xf32, #tpu.memory_space<vmem>>, %arg7: memref<48x16xf32, #tpu.memory_space<vmem>>, %arg8: memref<1x16xf32, #tpu.memory_space<vmem>>, %arg9: memref<8x16xf32, #tpu.memory_space<vmem>>) attributes {dimension_semantics = [], scalar_prefetch = 0 : i64, scratch_operands = 0 : i64, tpu.core_type = #tpu.core_type<tc>} {
    %c0 = arith.constant 0 : index
    %c0_0 = arith.constant 0 : index
    %0 = vector.load %arg0[%c0, %c0_0] : memref<8x32xf32, #tpu.memory_space<vmem>>, vector<8x32xf32>
    %c0_1 = arith.constant 0 : index
    %c0_2 = arith.constant 0 : index
    %1 = vector.load %arg1[%c0_1, %c0_2] : memref<32x64xf32, #tpu.memory_space<vmem>>, vector<32x64xf32>
    %cst = arith.constant dense<0.000000e+00> : vector<8x64xf32>
    %2 = tpu.matmul %0, %1, %cst {dimension_numbers = #tpu.dot_dimension_numbers<[1], [0], [0], [1], [0, 0, 1, 1], [], []>} : vector<8x32xf32>, vector<32x64xf32>, vector<8x64xf32> -> vector<8x64xf32>
    %cst_3 = arith.constant dense<0.000000e+00> : vector<64xf32>
    %3 = vector.multi_reduction <add>, %2, %cst_3 [0] : vector<8x64xf32> to vector<64xf32>
    %4 = vector.shape_cast %3 : vector<64xf32> to vector<1x64xf32>
    %5 = arith.mulf %2, %2 : vector<8x64xf32>
    %cst_4 = arith.constant dense<0.000000e+00> : vector<64xf32>
    %6 = vector.multi_reduction <add>, %5, %cst_4 [0] : vector<8x64xf32> to vector<64xf32>
    %7 = vector.shape_cast %6 : vector<64xf32> to vector<1x64xf32>
    %cst_5 = arith.constant 1.250000e-01 : f32
    %8 = vector.broadcast %cst_5 : f32 to vector<1x64xf32>
    %9 = arith.mulf %4, %8 : vector<1x64xf32>
    %cst_6 = arith.constant 1.250000e-01 : f32
    %10 = vector.broadcast %cst_6 : f32 to vector<1x64xf32>
    %11 = arith.mulf %7, %10 : vector<1x64xf32>
    %12 = arith.mulf %9, %9 : vector<1x64xf32>
    %13 = arith.subf %11, %12 : vector<1x64xf32>
    %cst_7 = arith.constant 0.000000e+00 : f32
    %14 = vector.broadcast %cst_7 : f32 to vector<1x64xf32>
    %15 = arith.maximumf %13, %14 : vector<1x64xf32>
    %16 = vector.broadcast %9 : vector<1x64xf32> to vector<8x64xf32>
    %17 = arith.subf %2, %16 : vector<8x64xf32>
    %cst_8 = arith.constant 1.000000e-03 : f32
    %18 = vector.broadcast %cst_8 : f32 to vector<1x64xf32>
    %19 = arith.addf %15, %18 : vector<1x64xf32>
    %20 = math.rsqrt %19 : vector<1x64xf32>
    %21 = vector.broadcast %20 : vector<1x64xf32> to vector<8x64xf32>
    %22 = arith.mulf %17, %21 : vector<8x64xf32>
    %c0_9 = arith.constant 0 : index
    %c0_10 = arith.constant 0 : index
    %23 = vector.load %arg2[%c0_9, %c0_10] : memref<1x64xf32, #tpu.memory_space<vmem>>, vector<1x64xf32>
    %24 = vector.broadcast %23 : vector<1x64xf32> to vector<8x64xf32>
    %25 = arith.mulf %22, %24 : vector<8x64xf32>
    %c0_11 = arith.constant 0 : index
    %c0_12 = arith.constant 0 : index
    %26 = vector.load %arg3[%c0_11, %c0_12] : memref<1x64xf32, #tpu.memory_space<vmem>>, vector<1x64xf32>
    %27 = vector.broadcast %26 : vector<1x64xf32> to vector<8x64xf32>
    %28 = arith.addf %25, %27 : vector<8x64xf32>
    %cst_13 = arith.constant 0.000000e+00 : f32
    %29 = vector.broadcast %cst_13 : f32 to vector<8x64xf32>
    %30 = arith.cmpf oge, %28, %29 : vector<8x64xf32>
    %cst_14 = arith.constant 2.000000e-01 : f32
    %31 = vector.broadcast %cst_14 : f32 to vector<8x64xf32>
    %32 = arith.mulf %31, %28 : vector<8x64xf32>
    %33 = arith.select %30, %28, %32 : vector<8x64xi1>, vector<8x64xf32>
    %c0_15 = arith.constant 0 : index
    %c0_16 = arith.constant 0 : index
    %34 = vector.load %arg4[%c0_15, %c0_16] : memref<64x48xf32, #tpu.memory_space<vmem>>, vector<64x48xf32>
    %cst_17 = arith.constant dense<0.000000e+00> : vector<8x48xf32>
    %35 = tpu.matmul %33, %34, %cst_17 {dimension_numbers = #tpu.dot_dimension_numbers<[1], [0], [0], [1], [0, 0, 1, 1], [], []>} : vector<8x64xf32>, vector<64x48xf32>, vector<8x48xf32> -> vector<8x48xf32>
    %cst_18 = arith.constant dense<0.000000e+00> : vector<48xf32>
    %36 = vector.multi_reduction <add>, %35, %cst_18 [0] : vector<8x48xf32> to vector<48xf32>
    %37 = vector.shape_cast %36 : vector<48xf32> to vector<1x48xf32>
    %38 = arith.mulf %35, %35 : vector<8x48xf32>
    %cst_19 = arith.constant dense<0.000000e+00> : vector<48xf32>
    %39 = vector.multi_reduction <add>, %38, %cst_19 [0] : vector<8x48xf32> to vector<48xf32>
    %40 = vector.shape_cast %39 : vector<48xf32> to vector<1x48xf32>
    %cst_20 = arith.constant 1.250000e-01 : f32
    %41 = vector.broadcast %cst_20 : f32 to vector<1x48xf32>
    %42 = arith.mulf %37, %41 : vector<1x48xf32>
    %cst_21 = arith.constant 1.250000e-01 : f32
    %43 = vector.broadcast %cst_21 : f32 to vector<1x48xf32>
    %44 = arith.mulf %40, %43 : vector<1x48xf32>
    %45 = arith.mulf %42, %42 : vector<1x48xf32>
    %46 = arith.subf %44, %45 : vector<1x48xf32>
    %cst_22 = arith.constant 0.000000e+00 : f32
    %47 = vector.broadcast %cst_22 : f32 to vector<1x48xf32>
    %48 = arith.maximumf %46, %47 : vector<1x48xf32>
    %49 = vector.broadcast %42 : vector<1x48xf32> to vector<8x48xf32>
    %50 = arith.subf %35, %49 : vector<8x48xf32>
    %cst_23 = arith.constant 1.000000e-03 : f32
    %51 = vector.broadcast %cst_23 : f32 to vector<1x48xf32>
    %52 = arith.addf %48, %51 : vector<1x48xf32>
    %53 = math.rsqrt %52 : vector<1x48xf32>
    %54 = vector.broadcast %53 : vector<1x48xf32> to vector<8x48xf32>
    %55 = arith.mulf %50, %54 : vector<8x48xf32>
    %c0_24 = arith.constant 0 : index
    %c0_25 = arith.constant 0 : index
    %56 = vector.load %arg5[%c0_24, %c0_25] : memref<1x48xf32, #tpu.memory_space<vmem>>, vector<1x48xf32>
    %57 = vector.broadcast %56 : vector<1x48xf32> to vector<8x48xf32>
    %58 = arith.mulf %55, %57 : vector<8x48xf32>
    %c0_26 = arith.constant 0 : index
    %c0_27 = arith.constant 0 : index
    %59 = vector.load %arg6[%c0_26, %c0_27] : memref<1x48xf32, #tpu.memory_space<vmem>>, vector<1x48xf32>
    %60 = vector.broadcast %59 : vector<1x48xf32> to vector<8x48xf32>
    %61 = arith.addf %58, %60 : vector<8x48xf32>
    %cst_28 = arith.constant 0.000000e+00 : f32
    %62 = vector.broadcast %cst_28 : f32 to vector<8x48xf32>
    %63 = arith.cmpf oge, %61, %62 : vector<8x48xf32>
    %cst_29 = arith.constant 2.000000e-01 : f32
    %64 = vector.broadcast %cst_29 : f32 to vector<8x48xf32>
    %65 = arith.mulf %64, %61 : vector<8x48xf32>
    %66 = arith.select %63, %61, %65 : vector<8x48xi1>, vector<8x48xf32>
    %c0_30 = arith.constant 0 : index
    %c0_31 = arith.constant 0 : index
    %67 = vector.load %arg7[%c0_30, %c0_31] : memref<48x16xf32, #tpu.memory_space<vmem>>, vector<48x16xf32>
    %cst_32 = arith.constant dense<0.000000e+00> : vector<8x16xf32>
    %68 = tpu.matmul %66, %67, %cst_32 {dimension_numbers = #tpu.dot_dimension_numbers<[1], [0], [0], [1], [0, 0, 1, 1], [], []>} : vector<8x48xf32>, vector<48x16xf32>, vector<8x16xf32> -> vector<8x16xf32>
    %c0_33 = arith.constant 0 : index
    %c0_34 = arith.constant 0 : index
    %69 = vector.load %arg8[%c0_33, %c0_34] : memref<1x16xf32, #tpu.memory_space<vmem>>, vector<1x16xf32>
    %70 = vector.broadcast %69 : vector<1x16xf32> to vector<8x16xf32>
    %71 = arith.addf %68, %70 : vector<8x16xf32>
    %c0_35 = arith.constant 0 : index
    %c0_36 = arith.constant 0 : index
    %72 = vector.load %arg9[%c0_35, %c0_36] : memref<8x16xf32, #tpu.memory_space<vmem>>, vector<8x16xf32>
    tpu.vector_store %arg9[%c0_35, %c0_36], %71 {strides = array<i32>} : memref<8x16xf32, #tpu.memory_space<vmem>>, vector<8x16xf32>,
    return
  }
}

</mosaic_0001>

<llo_original>
// kernel: classifier_forward.1
$region0: #{classifier_forward.1}
  #allocation0 [shape = 'u32[]', space=smem, size = 0x4, offset = 0x4, fixed_abs, tag = 'smem constant byte address 0x4 - core index']
  #allocation1 [shape = 'u32[144,128]{1,0:T(1,128)}', space=vmem, size = 0x12000, scoped, tag = 'internal scratch']
  %s0 = inlined_call_operand.vmem [shape: f32[8,32], index: 0, kind: input, shape index: {}]
  %s1 = inlined_call_operand.vmem [shape: f32[32,64], index: 1, kind: input, shape index: {}]
  %s2 = inlined_call_operand.vmem [shape: f32[1,64], index: 2, kind: input, shape index: {}]
  %s3 = inlined_call_operand.vmem [shape: f32[1,64], index: 3, kind: input, shape index: {}]
  %s4 = inlined_call_operand.vmem [shape: f32[64,48], index: 4, kind: input, shape index: {}]
  %s5 = inlined_call_operand.vmem [shape: f32[1,48], index: 5, kind: input, shape index: {}]
  %s6 = inlined_call_operand.vmem [shape: f32[1,48], index: 6, kind: input, shape index: {}]
  %s7 = inlined_call_operand.vmem [shape: f32[48,16], index: 7, kind: input, shape index: {}]
  %s8 = inlined_call_operand.vmem [shape: f32[1,16], index: 8, kind: input, shape index: {}]
  %s9 = inlined_call_operand.hbm [shape: f32[8,16], index: 9, kind: output, shape index: {}]
  %s10 = sld [smem:[#allocation0]]
  $region46: #{classifier_forward.1} parent=0
    _
  %s12 = ssub.s32 1, %s10
  %s13 = scalar_select 0, %s12, %s10
  $region1: #{classifier_forward.1} parent=0
    #allocation2 [shape = 'u8[4096]{0}', space=vmem, size = 0x1000, scoped, tag = 'output window, operand 0, single buffered']
    #allocation3 [shape = 's32[1]{0}', space=sflag, size = 0x4, scoped, tag = 'scoped memory for classifier_forward.1']
    %14 = vsyncpa [#allocation3], 0
    // Predicated region
    $region2: #{classifier_forward.1} parent=1 // pred_check
      _
    $region3: #{classifier_forward.1} parent=1 // pred_check_branch
      %16 = sbr.rel (0) target = $region5
    $region4: #{classifier_forward.1} parent=1 // pred_region
      _
    $region5: #{classifier_forward.1} parent=1 // pred_fallthru
      _
    // Predicated region
    $region6: #{classifier_forward.1} parent=1 // pred_check
      _
    $region7: #{classifier_forward.1} parent=1 // pred_check_branch
      %18 = sbr.rel (0) target = $region9
    $region8: #{classifier_forward.1} parent=1 // pred_region
      _
    $region9: #{classifier_forward.1} parent=1 // pred_fallthru
      _
    // Predicated region
    $region10: #{classifier_forward.1} parent=1 // pred_check
      _
    $region11: #{classifier_forward.1} parent=1 // pred_check_branch
      %20 = sbr.rel (0) target = $region13
    $region12: #{classifier_forward.1} parent=1 // pred_region
      _
    $region13: #{classifier_forward.1} parent=1 // pred_fallthru
      _
    // Predicated region
    $region14: #{classifier_forward.1} parent=1 // pred_check
      _
    $region15: #{classifier_forward.1} parent=1 // pred_check_branch
      %22 = sbr.rel (0) target = $region17
    $region16: #{classifier_forward.1} parent=1 // pred_region
      _
    $region17: #{classifier_forward.1} parent=1 // pred_fallthru
      _
    // Predicated region
    $region18: #{classifier_forward.1} parent=1 // pred_check
      _
    $region19: #{classifier_forward.1} parent=1 // pred_check_branch
      %24 = sbr.rel (0) target = $region21
    $region20: #{classifier_forward.1} parent=1 // pred_region
      _
    $region21: #{classifier_forward.1} parent=1 // pred_fallthru
      _
    // Predicated region
    $region22: #{classifier_forward.1} parent=1 // pred_check
      _
    $region23: #{classifier_forward.1} parent=1 // pred_check_branch
      %26 = sbr.rel (0) target = $region25
    $region24: #{classifier_forward.1} parent=1 // pred_region
      _
    $region25: #{classifier_forward.1} parent=1 // pred_fallthru
      _
    // Predicated region
    $region26: #{classifier_forward.1} parent=1 // pred_check
      _
    $region27: #{classifier_forward.1} parent=1 // pred_check_branch
      %28 = sbr.rel (0) target = $region29
    $region28: #{classifier_forward.1} parent=1 // pred_region
      _
    $region29: #{classifier_forward.1} parent=1 // pred_fallthru
      _
    // Predicated region
    $region30: #{classifier_forward.1} parent=1 // pred_check
      _
    $region31: #{classifier_forward.1} parent=1 // pred_check_branch
      %30 = sbr.rel (0) target = $region33
    $region32: #{classifier_forward.1} parent=1 // pred_region
      _
    $region33: #{classifier_forward.1} parent=1 // pred_fallthru
      _
    // Predicated region
    $region34: #{classifier_forward.1} parent=1 // pred_check
      _
    $region35: #{classifier_forward.1} parent=1 // pred_check_branch
      %32 = sbr.rel (0) target = $region37
    $region36: #{classifier_forward.1} parent=1 // pred_region
      _
    $region37: #{classifier_forward.1} parent=1 // pred_fallthru
      _
    %v33 = vld [vmem:[%s0] sm:$0xff]
    %v34 = vld [vmem:[%s1] sm:$0xff]
    %v35 = vld [vmem:[%s1 + $0x8] sm:$0xff]
    %v36 = vld [vmem:[%s1 + $0x10] sm:$0xff]
    %v37 = vld [vmem:[%s1 + $0x18] sm:$0xff]
    %vm38 = vcmask 261120
    %v40 = vsel %vm38, %v33, 0
    %42 = vmatprep.subr.mxu0 0.0
    %43 = vmatpush1.msra.mxu0 0.0
    %44 = vmatprep.subr.mxu0 0.0
    %45 = vmatpush1.msra.mxu0 0.0
    %46 = vmatprep.subr.mxu0 0.0
    %47 = vmatpush1.msra.mxu0 0.0
    %48 = vmatprep.subr.mxu0 0.0
    %49 = vmatpush1.msra.mxu0 0.0
    %50 = vmatprep.subr.mxu0 0.0
    %51 = vmatpush1.msra.mxu0 0.0
    %52 = vmatprep.subr.mxu0 0.0
    %53 = vmatpush1.msra.mxu0 0.0
    %54 = vmatprep.subr.mxu0 0.0
    %55 = vmatpush1.msra.mxu0 0.0
    %56 = vmatprep.subr.mxu0 0.0
    %57 = vmatpush1.msra.mxu0 0.0
    %58 = vmatprep.subr.mxu0 0.0
    %59 = vmatpush1.msra.mxu0 0.0
    %60 = vmatprep.subr.mxu0 0.0
    %61 = vmatpush1.msra.mxu0 0.0
    %62 = vmatprep.subr.mxu0 0.0
    %63 = vmatpush1.msra.mxu0 0.0
    %64 = vmatprep.subr.mxu0 0.0
    %65 = vmatpush1.msra.mxu0 0.0
    %66 = vmatprep.subr.mxu0 0.0
    %67 = vmatpush1.msra.mxu0 %v37
    %68 = vmatprep.subr.mxu0 0.0
    %69 = vmatpush1.msra.mxu0 %v36
    %70 = vmatprep.subr.mxu0 0.0
    %71 = vmatpush1.msra.mxu0 %v35
    %72 = vmatprep.subr.mxu0 0.0
    %73 = vmatpush1.msra.mxu0 %v34
    %74 = vmatprep.subr.mxu0 0.0
    %75 = vmatpush2.msra.mxu0 0.0
    %76 = vmatprep.subr.mxu0 0.0
    %77 = vmatpush2.msra.mxu0 0.0
    %78 = vmatprep.subr.mxu0 0.0
    %79 = vmatpush2.msra.mxu0 0.0
    %80 = vmatprep.subr.mxu0 0.0
    %81 = vmatpush2.msra.mxu0 0.0
    %82 = vmatprep.subr.mxu0 0.0
    %83 = vmatpush2.msra.mxu0 0.0
    %84 = vmatprep.subr.mxu0 0.0
    %85 = vmatpush2.msra.mxu0 0.0
    %86 = vmatprep.subr.mxu0 0.0
    %87 = vmatpush2.msra.mxu0 0.0
    %88 = vmatprep.subr.mxu0 0.0
    %89 = vmatpush2.msra.mxu0 0.0
    %90 = vmatprep.subr.mxu0 0.0
    %91 = vmatpush2.msra.mxu0 0.0
    %92 = vmatprep.subr.mxu0 0.0
    %93 = vmatpush2.msra.mxu0 0.0
    %94 = vmatprep.subr.mxu0 0.0
    %95 = vmatpush2.msra.mxu0 0.0
    %96 = vmatprep.subr.mxu0 0.0
    %97 = vmatpush2.msra.mxu0 0.0
    %98 = vmatprep.subr.mxu0 0.0
    %99 = vmatpush2.msra.mxu0 0.0
    %100 = vmatprep.subr.mxu0 0.0
    %101 = vmatpush2.msra.mxu0 0.0
    %102 = vmatprep.subr.mxu0 0.0
    %103 = vmatpush2.msra.mxu0 0.0
    %104 = vmatprep.subr.mxu0 0.0
    %105 = vmatpush2.msra.mxu0 0.0
    %106 = vmatprep.mubr.f32.mxu0 0.0
    %107 = vmatmul.mubr.f32.gmra.mxu0 %v40
    %v108 = vpop.f32.mrf.mxu0
    %v109 = vadd.f32 0.0, %v108
    %v110 = vpop.f32.mrf.mxu0
    %111 = vdwg.mxu0
    %vm112 = vcmask 523264
    %v113 = vsel %vm112, %v109, 0.0
    %v114 = vrot.slane %v113, 4
    %v115 = vadd.f32 %v113, %v114
    %v116 = vrot.slane %v115, 2
    %v117 = vadd.f32 %v115, %v116
    %v118 = vrot.slane %v117, 1
    %v119 = vadd.f32 %v117, %v118
    %v120 = vmul.f32 %v109, %v109
    %v121 = vsel %vm112, %v120, 0.0
    %v122 = vrot.slane %v121, 4
    %v123 = vadd.f32 %v121, %v122
    %v124 = vrot.slane %v123, 2
    %v125 = vadd.f32 %v123, %v124
    %v126 = vrot.slane %v125, 1
    %v127 = vadd.f32 %v125, %v126
    %v128 = vmul.f32 %v119, 0.125
    %v129 = vmul.f32 %v127, 0.125
    %v130 = vmul.f32 %v128, %v128
    %v131 = vsub.f32 %v129, %v130
    %v132 = vmax.f32 %v131, 0.0
    %v133 = vsub.f32 %v109, %v128
    %v134 = vadd.f32 %v132, 0.001
    %v135 = vrsqrt.pop %v134
    %v136 = vmul.f32 %v133, %v135
    %v137 = vld [vmem:[%s2] sm:$0x1]
    %v139 = vlaneseq
    %v140 = vshrl.u32 %v139, 7
    %v141 = vsub.s32 0, %v140
    %v142 = vrot.slane %v137, %v141
    %v144 = vmul.f32 %v136, %v142
    %v145 = vld [vmem:[%s3] sm:$0x1]
    %v147 = vlaneseq
    %v148 = vshrl.u32 %v147, 7
    %v149 = vsub.s32 0, %v148
    %v150 = vrot.slane %v145, %v149
    %v152 = vadd.f32 %v144, %v150
    %vm153 = vcmp.ge.f32.partialorder %v152, 0.0
    %v154 = vmul.f32 %v152, 0.2
    %v155 = vsel %vm153, %v152, %v154
    %v156 = vld [vmem:[%s4] sm:$0xff]
    %v157 = vld [vmem:[%s4 + $0x8] sm:$0xff]
    %v158 = vld [vmem:[%s4 + $0x10] sm:$0xff]
    %v159 = vld [vmem:[%s4 + $0x18] sm:$0xff]
    %v160 = vld [vmem:[%s4 + $0x20] sm:$0xff]
    %v161 = vld [vmem:[%s4 + $0x28] sm:$0xff]
    %v162 = vld [vmem:[%s4 + $0x30] sm:$0xff]
    %v163 = vld [vmem:[%s4 + $0x38] sm:$0xff]
    %v165 = vsel %vm112, %v155, 0
    %167 = vmatprep.subr.mxu0 0.0
    %168 = vmatpush1.msra.mxu0 0.0
    %169 = vmatprep.subr.mxu0 0.0
    %170 = vmatpush1.msra.mxu0 0.0
    %171 = vmatprep.subr.mxu0 0.0
    %172 = vmatpush1.msra.mxu0 0.0
    %173 = vmatprep.subr.mxu0 0.0
    %174 = vmatpush1.msra.mxu0 0.0
    %175 = vmatprep.subr.mxu0 0.0
    %176 = vmatpush1.msra.mxu0 0.0
    %177 = vmatprep.subr.mxu0 0.0
    %178 = vmatpush1.msra.mxu0 0.0
    %179 = vmatprep.subr.mxu0 0.0
    %180 = vmatpush1.msra.mxu0 0.0
    %181 = vmatprep.subr.mxu0 0.0
    %182 = vmatpush1.msra.mxu0 0.0
    %183 = vmatprep.subr.mxu0 0.0
    %184 = vmatpush1.msra.mxu0 %v163
    %185 = vmatprep.subr.mxu0 0.0
    %186 = vmatpush1.msra.mxu0 %v162
    %187 = vmatprep.subr.mxu0 0.0
    %188 = vmatpush1.msra.mxu0 %v161
    %189 = vmatprep.subr.mxu0 0.0
    %190 = vmatpush1.msra.mxu0 %v160
    %191 = vmatprep.subr.mxu0 0.0
    %192 = vmatpush1.msra.mxu0 %v159
    %193 = vmatprep.subr.mxu0 0.0
    %194 = vmatpush1.msra.mxu0 %v158
    %195 = vmatprep.subr.mxu0 0.0
    %196 = vmatpush1.msra.mxu0 %v157
    %197 = vmatprep.subr.mxu0 0.0
    %198 = vmatpush1.msra.mxu0 %v156
    %199 = vmatprep.subr.mxu0 0.0
    %200 = vmatpush2.msra.mxu0 0.0
    %201 = vmatprep.subr.mxu0 0.0
    %202 = vmatpush2.msra.mxu0 0.0
    %203 = vmatprep.subr.mxu0 0.0
    %204 = vmatpush2.msra.mxu0 0.0
    %205 = vmatprep.subr.mxu0 0.0
    %206 = vmatpush2.msra.mxu0 0.0
    %207 = vmatprep.subr.mxu0 0.0
    %208 = vmatpush2.msra.mxu0 0.0
    %209 = vmatprep.subr.mxu0 0.0
    %210 = vmatpush2.msra.mxu0 0.0
    %211 = vmatprep.subr.mxu0 0.0
    %212 = vmatpush2.msra.mxu0 0.0
    %213 = vmatprep.subr.mxu0 0.0
    %214 = vmatpush2.msra.mxu0 0.0
    %215 = vmatprep.subr.mxu0 0.0
    %216 = vmatpush2.msra.mxu0 0.0
    %217 = vmatprep.subr.mxu0 0.0
    %218 = vmatpush2.msra.mxu0 0.0
    %219 = vmatprep.subr.mxu0 0.0
    %220 = vmatpush2.msra.mxu0 0.0
    %221 = vmatprep.subr.mxu0 0.0
    %222 = vmatpush2.msra.mxu0 0.0
    %223 = vmatprep.subr.mxu0 0.0
    %224 = vmatpush2.msra.mxu0 0.0
    %225 = vmatprep.subr.mxu0 0.0
    %226 = vmatpush2.msra.mxu0 0.0
    %227 = vmatprep.subr.mxu0 0.0
    %228 = vmatpush2.msra.mxu0 0.0
    %229 = vmatprep.subr.mxu0 0.0
    %230 = vmatpush2.msra.mxu0 0.0
    %231 = vmatprep.mubr.f32.mxu0 0.0
    %232 = vmatmul.mubr.f32.gmra.mxu0 %v165
    %v233 = vpop.f32.mrf.mxu0
    %v234 = vadd.f32 0.0, %v233
    %v235 = vpop.f32.mrf.mxu0
    %236 = vdwg.mxu0
    %vm237 = vcmask 392192
    %v238 = vsel %vm237, %v234, 0.0
    %v239 = vrot.slane %v238, 4
    %v240 = vadd.f32 %v238, %v239
    %v241 = vrot.slane %v240, 2
    %v242 = vadd.f32 %v240, %v241
    %v243 = vrot.slane %v242, 1
    %v244 = vadd.f32 %v242, %v243
    %v245 = vmul.f32 %v234, %v234
    %v246 = vsel %vm237, %v245, 0.0
    %v247 = vrot.slane %v246, 4
    %v248 = vadd.f32 %v246, %v247
    %v249 = vrot.slane %v248, 2
    %v250 = vadd.f32 %v248, %v249
    %v251 = vrot.slane %v250, 1
    %v252 = vadd.f32 %v250, %v251
    %v253 = vmul.f32 %v244, 0.125
    %v254 = vmul.f32 %v252, 0.125
    %v255 = vmul.f32 %v253, %v253
    %v256 = vsub.f32 %v254, %v255
    %v257 = vmax.f32 %v256, 0.0
    %v258 = vsub.f32 %v234, %v253
    %v259 = vadd.f32 %v257, 0.001
    %v260 = vrsqrt.pop %v259
    %v261 = vmul.f32 %v258, %v260
    %v262 = vld [vmem:[%s5] sm:$0x1]
    %v264 = vlaneseq
    %v265 = vshrl.u32 %v264, 7
    %v266 = vsub.s32 0, %v265
    %v267 = vrot.slane %v262, %v266
    %v269 = vmul.f32 %v261, %v267
    %v270 = vld [vmem:[%s6] sm:$0x1]
    %v272 = vlaneseq
    %v273 = vshrl.u32 %v272, 7
    %v274 = vsub.s32 0, %v273
    %v275 = vrot.slane %v270, %v274
    %v277 = vadd.f32 %v269, %v275
    %vm278 = vcmp.ge.f32.partialorder %v277, 0.0
    %v279 = vmul.f32 %v277, 0.2
    %v280 = vsel %vm278, %v277, %v279
    %v281 = vld [vmem:[%s7] sm:$0xff]
    %v282 = vld [vmem:[%s7 + $0x8] sm:$0xff]
    %v283 = vld [vmem:[%s7 + $0x10] sm:$0xff]
    %v284 = vld [vmem:[%s7 + $0x18] sm:$0xff]
    %v285 = vld [vmem:[%s7 + $0x20] sm:$0xff]
    %v286 = vld [vmem:[%s7 + $0x28] sm:$0xff]
    %v287 = vld [vmem:[%s8] sm:$0x1]
    %v289 = vlaneseq
    %v290 = vshrl.u32 %v289, 7
    %v291 = vsub.s32 0, %v290
    %v292 = vrot.slane %v287, %v291
    %v295 = vsel %vm237, %v280, 0
    %297 = vmatprep.subr.mxu0 0.0
    %298 = vmatpush1.msra.mxu0 0.0
    %299 = vmatprep.subr.mxu0 0.0
    %300 = vmatpush1.msra.mxu0 0.0
    %301 = vmatprep.subr.mxu0 0.0
    %302 = vmatpush1.msra.mxu0 0.0
    %303 = vmatprep.subr.mxu0 0.0
    %304 = vmatpush1.msra.mxu0 0.0
    %305 = vmatprep.subr.mxu0 0.0
    %306 = vmatpush1.msra.mxu0 0.0
    %307 = vmatprep.subr.mxu0 0.0
    %308 = vmatpush1.msra.mxu0 0.0
    %309 = vmatprep.subr.mxu0 0.0
    %310 = vmatpush1.msra.mxu0 0.0
    %311 = vmatprep.subr.mxu0 0.0
    %312 = vmatpush1.msra.mxu0 0.0
    %313 = vmatprep.subr.mxu0 0.0
    %314 = vmatpush1.msra.mxu0 0.0
    %315 = vmatprep.subr.mxu0 0.0
    %316 = vmatpush1.msra.mxu0 0.0
    %317 = vmatprep.subr.mxu0 0.0
    %318 = vmatpush1.msra.mxu0 %v286
    %319 = vmatprep.subr.mxu0 0.0
    %320 = vmatpush1.msra.mxu0 %v285
    %321 = vmatprep.subr.mxu0 0.0
    %322 = vmatpush1.msra.mxu0 %v284
    %323 = vmatprep.subr.mxu0 0.0
    %324 = vmatpush1.msra.mxu0 %v283
    %325 = vmatprep.subr.mxu0 0.0
    %326 = vmatpush1.msra.mxu0 %v282
    %327 = vmatprep.subr.mxu0 0.0
    %328 = vmatpush1.msra.mxu0 %v281
    %329 = vmatprep.subr.mxu0 0.0
    %330 = vmatpush2.msra.mxu0 0.0
    %331 = vmatprep.subr.mxu0 0.0
    %332 = vmatpush2.msra.mxu0 0.0
    %333 = vmatprep.subr.mxu0 0.0
    %334 = vmatpush2.msra.mxu0 0.0
    %335 = vmatprep.subr.mxu0 0.0
    %336 = vmatpush2.msra.mxu0 0.0
    %337 = vmatprep.subr.mxu0 0.0
    %338 = vmatpush2.msra.mxu0 0.0
    %339 = vmatprep.subr.mxu0 0.0
    %340 = vmatpush2.msra.mxu0 0.0
    %341 = vmatprep.subr.mxu0 0.0
    %342 = vmatpush2.msra.mxu0 0.0
    %343 = vmatprep.subr.mxu0 0.0
    %344 = vmatpush2.msra.mxu0 0.0
    %345 = vmatprep.subr.mxu0 0.0
    %346 = vmatpush2.msra.mxu0 0.0
    %347 = vmatprep.subr.mxu0 0.0
    %348 = vmatpush2.msra.mxu0 0.0
    %349 = vmatprep.subr.mxu0 0.0
    %350 = vmatpush2.msra.mxu0 0.0
    %351 = vmatprep.subr.mxu0 0.0
    %352 = vmatpush2.msra.mxu0 0.0
    %353 = vmatprep.subr.mxu0 0.0
    %354 = vmatpush2.msra.mxu0 0.0
    %355 = vmatprep.subr.mxu0 0.0
    %356 = vmatpush2.msra.mxu0 0.0
    %357 = vmatprep.subr.mxu0 0.0
    %358 = vmatpush2.msra.mxu0 0.0
    %359 = vmatprep.subr.mxu0 0.0
    %360 = vmatpush2.msra.mxu0 0.0
    %361 = vmatprep.mubr.f32.mxu0 0.0
    %362 = vmatmul.mubr.f32.gmra.mxu0 %v295
    %v363 = vpop.f32.mrf.mxu0
    %v364 = vadd.f32 %v292, %v363
    %v365 = vpop.f32.mrf.mxu0
    %366 = vdwg.mxu0
    %vm367 = vcmask 130048
    %368 = vst.msk [vmem:[#allocation2] sm:$0xff] %vm367, %v364
    // Predicated region
    $region38: #{classifier_forward.1} parent=1 // pred_check
      _
    $region39: #{classifier_forward.1} parent=1 // pred_check_branch
      %370 = sbr.rel (0) target = $region41
    $region40: #{classifier_forward.1} parent=1 // pred_region
      %s372 = ssub.s32 128, 128
      %373 = vsyncadd [#allocation3], %s372
      %s375 = sshll.u32 [#allocation2], 4
      %s376 = int_to_ptr.vmem [resolvable:$true] %s375
      %378 = dma.vmem_to_hbm [thread:$0]  %s376, 128, %s9, [#allocation3]
    $region41: #{classifier_forward.1} parent=1 // pred_fallthru
      _
    // Predicated region
    $region42: #{classifier_forward.1} parent=1 // pred_check
      _
    $region43: #{classifier_forward.1} parent=1 // pred_check_branch
      %380 = sbr.rel (0) target = $region45
    $region44: #{classifier_forward.1} parent=1 // pred_region
      %381 = dma.done [#allocation3], 128
    $region45: #{classifier_forward.1} parent=1 // pred_fallthru
      _
    %382 = vsyncpa [#allocation3], 1

</llo_original>
